<compile_context>
chip_gen: v7x
topology: tpu7x:2x2x1
jax: 0.10.0
libtpu: 0.0.40
codegen_flags: <defaults>
</compile_context>

<pallas_src>
import jax
import jax.numpy as jnp
from jax import lax
from jax.experimental import pallas as pl
from jax.experimental.pallas import tpu as pltpu


def _round_up(x: int, m: int) -> int:
    return (x + m - 1) // m * m


def _cdiv(a: int, b: int) -> int:
    return -(-a // b)


def _make_gram_kernel(inv_norm: float):
    """Kernel over grid (nm, nk): row-tiles of G x K-reduction tiles.

    fl_ref : (tm, tk)  row tile of the features (LHS)
    fr_ref : (M,  tk)  all rows of the features (RHS), same K tile
    g_ref  : (tm, M)   f32 output row-block, resident across the K axis
    """

    def kernel(fl_ref, fr_ref, g_ref):
        k = pl.program_id(1)

        @pl.when(k == 0)
        def _():
            g_ref[...] = jnp.zeros_like(g_ref)

        # Contract dim 1 of both operands -> (tm, M) on the MXU, f32 accumulation,
        # no explicit transpose (keeps the XLU out of the hot path).
        g_ref[...] += lax.dot_general(
            fl_ref[...],
            fr_ref[...],
            dimension_numbers=(((1,), (1,)), ((), ())),
            preferred_element_type=jnp.float32,
        )

        @pl.when(k == pl.num_programs(1) - 1)
        def _():
            # Normalize by the TRUE (unpadded) M*K, baked in as a constant.
            g_ref[...] = g_ref[...] * jnp.float32(inv_norm)

    return kernel


def gram_matrix_pallas(x):
    """Pallas-backed gram matrix of an NCHW tensor: (f @ f.T) / (a*b*c*d), f32."""
    a, b, c, d = x.shape
    M = a * b
    K = c * d
    feats = x.reshape(M, K)

    # Row tile: split the output rows for megacore parallelism when M is large
    # (also shrinks the per-core resident accumulator, important on v7x).
    tm = 256 if (M % 256 == 0 and M > 256) else M
    nm = M // tm

    # K tile: largest multiple of 128 (capped at 2048) that fits a conservative
    # VMEM budget. Budget counts double-buffered LHS/RHS input tiles plus the
    # resident output row-block.
    itemsize = jnp.dtype(feats.dtype).itemsize
    vmem_budget = 30 * 1024 * 1024
    fixed = 2 * tm * M * 4                      # output row-block (f32, buffered)
    per_col = 2 * (tm + M) * itemsize           # LHS + RHS bytes per K column (x2 buffers)
    tk_cap = max(128, (vmem_budget - fixed) // max(per_col, 1))
    tk_max = max(128, min(2048, (tk_cap // 128) * 128))

    # Pad K to a multiple of 128, choose nk, then pad exactly to nk * tk.
    k128 = _round_up(K, 128)
    nk = _cdiv(k128, tk_max)
    tk = _round_up(_cdiv(k128, nk), 128)
    k_pad = nk * tk
    if k_pad != K:
        # Zero columns do not change feats @ feats.T.
        feats = jnp.pad(feats, ((0, 0), (0, k_pad - K)))

    inv_norm = 1.0 / float(M * K)               # true K, not the padded one
    kernel = _make_gram_kernel(inv_norm)

    grid_spec = pltpu.PrefetchScalarGridSpec(
        num_scalar_prefetch=0,
        grid=(nm, nk),
        in_specs=[
            pl.BlockSpec((tm, tk), lambda i, k: (i, k)),   # LHS row tile
            pl.BlockSpec((M, tk), lambda i, k: (0, k)),    # RHS: all rows, same K tile
        ],
        out_specs=pl.BlockSpec((tm, M), lambda i, k: (i, 0)),  # resident accumulator
    )

    G = pl.pallas_call(
        kernel,
        out_shape=jax.ShapeDtypeStruct((M, M), jnp.float32),
        grid_spec=grid_spec,
        compiler_params=pltpu.CompilerParams(
            dimension_semantics=("parallel", "arbitrary"),
            vmem_limit_bytes=48 * 1024 * 1024,
        ),
    )(feats, feats)
    return G


class StyleLossPallas:
    """Mirror of the PyTorch StyleLoss module: stores the target gram at init;
    __call__ computes self.loss = mse(gram(x), target) and returns x unchanged."""

    def __init__(self, target_feature):
        self.target = gram_matrix_pallas(target_feature)
        self.loss = None

    def __call__(self, x):
        G = gram_matrix_pallas(x)
        # MSE epilogue in plain XLA on the (M, M) gram matrices (per perf review:
        # keeps target_G out of VMEM and avoids an in-kernel cross-lane reduction).
        self.loss = jnp.mean(jnp.square(G - self.target))
        return x


if __name__ == "__main__":
    key = jax.random.PRNGKey(0)
    k1, k2, k3, k4 = jax.random.split(key, 4)

    # --- main module test: batch=2, channels=4, spatial=16x16 (NCHW) ---
    target_feature = jax.random.normal(k1, (2, 4, 16, 16), dtype=jnp.float32)
    x = jax.random.normal(k2, (2, 4, 16, 16), dtype=jnp.float32)

    module = StyleLossPallas(target_feature)
    out = module(x)
    jax.block_until_ready(out)
    loss = jax.block_until_ready(module.loss)

    def ref_gram(t):
        a, b, c, d = t.shape
        f = t.reshape(a * b, c * d).astype(jnp.float32)
        g = jnp.matmul(f, f.T, precision=lax.Precision.HIGHEST)
        return g / (a * b * c * d)

    G_ref_t = ref_gram(target_feature)
    G_ref_x = ref_gram(x)
    loss_ref = jnp.mean((G_ref_x - G_ref_t) ** 2)

    assert out.shape == x.shape and jnp.allclose(out, x)
    assert jnp.allclose(module.target, G_ref_t, atol=1e-5, rtol=1e-5)
    assert jnp.allclose(loss, loss_ref, atol=1e-6, rtol=1e-5)

    # --- padding path: K = 17*19 = 323 (not a multiple of 128) ---
    y = jax.random.normal(k3, (2, 8, 17, 19), dtype=jnp.float32)
    G_y = jax.block_until_ready(gram_matrix_pallas(y))
    assert jnp.allclose(G_y, ref_gram(y), atol=1e-5, rtol=1e-5)

    # --- multi-tile path: M = 512 (row-parallel, tm=256), K = 2304 (nk=2) ---
    z = jax.random.normal(k4, (2, 256, 48, 48), dtype=jnp.float32)
    G_z = jax.block_until_ready(gram_matrix_pallas(z))
    assert jnp.allclose(G_z, ref_gram(z), atol=1e-6, rtol=1e-4)

    print("KERNEL_OK")
</pallas_src>

<mosaic_0001>
module attributes {stable_mosaic.version = 11 : i64} {
  func.func @kernel(%arg0: i32, %arg1: i32, %arg2: memref<8x256xf32, #tpu.memory_space<vmem>>, %arg3: memref<8x256xf32, #tpu.memory_space<vmem>>, %arg4: memref<8x8xf32, #tpu.memory_space<vmem>>) attributes {dimension_semantics = [#tpu.dimension_semantics<parallel>, #tpu.dimension_semantics<arbitrary>], iteration_bounds = array<i64: 1, 1>, scalar_prefetch = 0 : i64, scratch_operands = 0 : i64, tpu.core_type = #tpu.core_type<tc>, window_params = [{transform_indices = @transform_0, window_bounds = array<i64: 8, 256>}, {transform_indices = @transform_1, window_bounds = array<i64: 8, 256>}, {transform_indices = @transform_2, window_bounds = array<i64: 8, 8>}]} {
    %c0_i32 = arith.constant 0 : i32
    %0 = arith.cmpi eq, %arg1, %c0_i32 : i32
    %1 = arith.extui %0 : i1 to i32
    %c0_i32_0 = arith.constant 0 : i32
    %2 = arith.cmpi ne, %1, %c0_i32_0 : i32
    scf.if %2 {
      %cst_10 = arith.constant 0.000000e+00 : f32
      %12 = vector.broadcast %cst_10 : f32 to vector<8x8xf32>
      %c0_11 = arith.constant 0 : index
      %c0_12 = arith.constant 0 : index
      %13 = vector.load %arg4[%c0_11, %c0_12] : memref<8x8xf32, #tpu.memory_space<vmem>>, vector<8x8xf32>
      tpu.vector_store %arg4[%c0_11, %c0_12], %12 {strides = array<i32>} : memref<8x8xf32, #tpu.memory_space<vmem>>, vector<8x8xf32>,
    } else {
    }
    %c0 = arith.constant 0 : index
    %c0_1 = arith.constant 0 : index
    %3 = vector.load %arg4[%c0, %c0_1] : memref<8x8xf32, #tpu.memory_space<vmem>>, vector<8x8xf32>
    %c0_2 = arith.constant 0 : index
    %c0_3 = arith.constant 0 : index
    %4 = vector.load %arg2[%c0_2, %c0_3] : memref<8x256xf32, #tpu.memory_space<vmem>>, vector<8x256xf32>
    %c0_4 = arith.constant 0 : index
    %c0_5 = arith.constant 0 : index
    %5 = vector.load %arg3[%c0_4, %c0_5] : memref<8x256xf32, #tpu.memory_space<vmem>>, vector<8x256xf32>
    %cst = arith.constant dense<0.000000e+00> : vector<8x8xf32>
    %6 = tpu.matmul %4, %5, %cst {dimension_numbers = #tpu.dot_dimension_numbers<[1], [1], [0], [0], [0, 0, 1, 0], [], []>} : vector<8x256xf32>, vector<8x256xf32>, vector<8x8xf32> -> vector<8x8xf32>
    %7 = arith.addf %3, %6 : vector<8x8xf32>
    %c0_6 = arith.constant 0 : index
    %c0_7 = arith.constant 0 : index
    %8 = vector.load %arg4[%c0_6, %c0_7] : memref<8x8xf32, #tpu.memory_space<vmem>>, vector<8x8xf32>
    tpu.vector_store %arg4[%c0_6, %c0_7], %7 {strides = array<i32>} : memref<8x8xf32, #tpu.memory_space<vmem>>, vector<8x8xf32>,
    %c0_i32_8 = arith.constant 0 : i32
    %9 = arith.cmpi eq, %arg1, %c0_i32_8 : i32
    %10 = arith.extui %9 : i1 to i32
    %c0_i32_9 = arith.constant 0 : i32
    %11 = arith.cmpi ne, %10, %c0_i32_9 : i32
    scf.if %11 {
      %c0_10 = arith.constant 0 : index
      %c0_11 = arith.constant 0 : index
      %12 = vector.load %arg4[%c0_10, %c0_11] : memref<8x8xf32, #tpu.memory_space<vmem>>, vector<8x8xf32>
      %cst_12 = arith.constant 4.8828125E-4 : f32
      %13 = vector.broadcast %cst_12 : f32 to vector<8x8xf32>
      %14 = arith.mulf %12, %13 : vector<8x8xf32>
      %c0_13 = arith.constant 0 : index
      %c0_14 = arith.constant 0 : index
      %15 = vector.load %arg4[%c0_13, %c0_14] : memref<8x8xf32, #tpu.memory_space<vmem>>, vector<8x8xf32>
      tpu.vector_store %arg4[%c0_13, %c0_14], %14 {strides = array<i32>} : memref<8x8xf32, #tpu.memory_space<vmem>>, vector<8x8xf32>,
    } else {
    }
    return
  }
  func.func @transform_0(%arg0: i32, %arg1: i32) -> (i32, i32) {
    %c0_i32 = arith.constant 0 : i32
    return %arg0, %arg1 : i32, i32
  }
  func.func @transform_1(%arg0: i32, %arg1: i32) -> (i32, i32) {
    %c0_i32 = arith.constant 0 : i32
    %c0_i32_0 = arith.constant 0 : i32
    return %c0_i32, %arg1 : i32, i32
  }
  func.func @transform_2(%arg0: i32, %arg1: i32) -> (i32, i32) {
    %c0_i32 = arith.constant 0 : i32
    %c0_i32_0 = arith.constant 0 : i32
    return %arg0, %c0_i32 : i32, i32
  }
}

</mosaic_0001>

<llo_original>
// kernel: tpu_custom_call.1
$region0: #{tpu_custom_call.1}
  #allocation0 [shape = 'u32[]', space=smem, size = 0x4, offset = 0x4, fixed_abs, tag = 'smem constant byte address 0x4 - core index']
  #allocation1 [shape = 'u32[144,128]{1,0:T(1,128)}', space=vmem, size = 0x12000, scoped, tag = 'internal scratch']
  %s0 = inlined_call_operand.hbm [shape: f32[8,256], index: 0, kind: input, shape index: {}]
  %s1 = inlined_call_operand.hbm [shape: f32[8,256], index: 1, kind: input, shape index: {}]
  %s2 = inlined_call_operand.hbm [shape: f32[8,8], index: 2, kind: output, shape index: {}]
  %s3 = sld [smem:[#allocation0]]
  $region34: #{tpu_custom_call.1} parent=0
    _
  %s5 = ssub.s32 1, %s3
  %s6 = scalar_select 0, %s5, %s3
  $region1: #{tpu_custom_call.1} parent=0
    #allocation2 [shape = 'u8[8192]{0}', space=vmem, size = 0x2000, scoped, tag = 'input window, operand 0, single buffered']
    #allocation3 [shape = 's32[1]{0}', space=sflag, size = 0x4, scoped, tag = 'scoped memory for tpu_custom_call.1']
    #allocation4 [shape = 's32[1]{0}', space=sflag, size = 0x4, scoped, tag = 'scoped memory for tpu_custom_call.1']
    #allocation5 [shape = 'u8[8192]{0}', space=vmem, size = 0x2000, scoped, tag = 'input window, operand 1, single buffered']
    #allocation6 [shape = 's32[1]{0}', space=sflag, size = 0x4, scoped, tag = 'scoped memory for tpu_custom_call.1']
    #allocation7 [shape = 'u8[4096]{0}', space=vmem, size = 0x1000, scoped, tag = 'output window, operand 0, single buffered']
    %7 = vsyncpa [#allocation3], 0
    %8 = vsyncpa [#allocation6], 0
    %9 = vsyncpa [#allocation4], 0
    // Predicated region
    $region2: #{tpu_custom_call.1} parent=1 // pred_check
      _
    $region3: #{tpu_custom_call.1} parent=1 // pred_check_branch
      %11 = sbr.rel (0) target = $region5
    $region4: #{tpu_custom_call.1} parent=1 // pred_region
      %s13 = ssub.s32 256, 256
      %14 = vsyncadd [#allocation3], %s13
      %s16 = sshll.u32 [#allocation2], 4
      %s17 = int_to_ptr.vmem [resolvable:$true] %s16
      %19 = dma.hbm_to_vmem [thread:$0]  %s0, 256, %s17, [#allocation3]
    $region5: #{tpu_custom_call.1} parent=1 // pred_fallthru
      _
    // Predicated region
    $region6: #{tpu_custom_call.1} parent=1 // pred_check
      _
    $region7: #{tpu_custom_call.1} parent=1 // pred_check_branch
      %21 = sbr.rel (0) target = $region9
    $region8: #{tpu_custom_call.1} parent=1 // pred_region
      %s23 = ssub.s32 256, 256
      %24 = vsyncadd [#allocation6], %s23
      %s26 = sshll.u32 [#allocation5], 4
      %s27 = int_to_ptr.vmem [resolvable:$true] %s26
      %29 = dma.hbm_to_vmem [thread:$0]  %s1, 256, %s27, [#allocation6]
    $region9: #{tpu_custom_call.1} parent=1 // pred_fallthru
      _
    // Predicated region
    $region10: #{tpu_custom_call.1} parent=1 // pred_check
      _
    $region11: #{tpu_custom_call.1} parent=1 // pred_check_branch
      %31 = sbr.rel (0) target = $region13
    $region12: #{tpu_custom_call.1} parent=1 // pred_region
      %32 = dma.done [#allocation3], 256
    $region13: #{tpu_custom_call.1} parent=1 // pred_fallthru
      _
    // Predicated region
    $region14: #{tpu_custom_call.1} parent=1 // pred_check
      _
    $region15: #{tpu_custom_call.1} parent=1 // pred_check_branch
      %34 = sbr.rel (0) target = $region17
    $region16: #{tpu_custom_call.1} parent=1 // pred_region
      %35 = dma.done [#allocation6], 256
    $region17: #{tpu_custom_call.1} parent=1 // pred_fallthru
      _
    %p36 = scmp.eq.s32.totalorder 0, 0
    // Predicated region
    $region18: #{tpu_custom_call.1} parent=1 // pred_check
      %p37 = pneg %p36
    $region19: #{tpu_custom_call.1} parent=1 // pred_check_branch
      %39 = sbr.rel (%p37) target = $region21
    $region20: #{tpu_custom_call.1} parent=1 // pred_region
      %vm40 = vcmask 64512
      %41 = vst.msk [vmem:[#allocation7] sm:$0xff] %vm40, 0.0
    $region21: #{tpu_custom_call.1} parent=1 // pred_fallthru
      _
    %v42 = vld [vmem:[#allocation7] sm:$0xff]
    %v43 = vld [vmem:[#allocation2] sm:$0xff]
    %v44 = vld [vmem:[#allocation2 + $0x8] sm:$0xff]
    %v45 = vld [vmem:[#allocation5] sm:$0xff]
    %v46 = vld [vmem:[#allocation5 + $0x8] sm:$0xff]
    %47 = vmatprep.subr.mxu0 %v46
    %48 = vmatpush1.xpose.msra.mxu0 %v45
    %49 = vmatprep.subr.mxu0 0.0
    %50 = vmatpush1.xpose.msra.mxu0 0.0
    %51 = vmatprep.subr.mxu0 0.0
    %52 = vmatpush1.xpose.msra.mxu0 0.0
    %53 = vmatprep.subr.mxu0 0.0
    %54 = vmatpush1.xpose.msra.mxu0 0.0
    %55 = vmatprep.subr.mxu0 0.0
    %56 = vmatpush1.xpose.msra.mxu0 0.0
    %57 = vmatprep.subr.mxu0 0.0
    %58 = vmatpush1.xpose.msra.mxu0 0.0
    %59 = vmatprep.subr.mxu0 0.0
    %60 = vmatpush1.xpose.msra.mxu0 0.0
    %61 = vmatprep.subr.mxu0 0.0
    %62 = vmatpush1.xpose.msra.mxu0 0.0
    %63 = vmatprep.subr.mxu0 0.0
    %64 = vmatpush1.xpose.msra.mxu0 0.0
    %65 = vmatprep.subr.mxu0 0.0
    %66 = vmatpush1.xpose.msra.mxu0 0.0
    %67 = vmatprep.subr.mxu0 0.0
    %68 = vmatpush1.xpose.msra.mxu0 0.0
    %69 = vmatprep.subr.mxu0 0.0
    %70 = vmatpush1.xpose.msra.mxu0 0.0
    %71 = vmatprep.subr.mxu0 0.0
    %72 = vmatpush1.xpose.msra.mxu0 0.0
    %73 = vmatprep.subr.mxu0 0.0
    %74 = vmatpush1.xpose.msra.mxu0 0.0
    %75 = vmatprep.subr.mxu0 0.0
    %76 = vmatpush1.xpose.msra.mxu0 0.0
    %77 = vmatprep.subr.mxu0 0.0
    %78 = vmatpush1.xpose.msra.mxu0 0.0
    %79 = vmatprep.subr.mxu0 0.0
    %80 = vmatpush1.xpose.msra.mxu0 0.0
    %81 = vmatprep.subr.mxu0 0.0
    %82 = vmatpush1.xpose.msra.mxu0 0.0
    %83 = vmatprep.subr.mxu0 0.0
    %84 = vmatpush1.xpose.msra.mxu0 0.0
    %85 = vmatprep.subr.mxu0 0.0
    %86 = vmatpush1.xpose.msra.mxu0 0.0
    %87 = vmatprep.subr.mxu0 0.0
    %88 = vmatpush1.xpose.msra.mxu0 0.0
    %89 = vmatprep.subr.mxu0 0.0
    %90 = vmatpush1.xpose.msra.mxu0 0.0
    %91 = vmatprep.subr.mxu0 0.0
    %92 = vmatpush1.xpose.msra.mxu0 0.0
    %93 = vmatprep.subr.mxu0 0.0
    %94 = vmatpush1.xpose.msra.mxu0 0.0
    %95 = vmatprep.subr.mxu0 0.0
    %96 = vmatpush1.xpose.msra.mxu0 0.0
    %97 = vmatprep.subr.mxu0 0.0
    %98 = vmatpush1.xpose.msra.mxu0 0.0
    %99 = vmatprep.subr.mxu0 0.0
    %100 = vmatpush1.xpose.msra.mxu0 0.0
    %101 = vmatprep.subr.mxu0 0.0
    %102 = vmatpush1.xpose.msra.mxu0 0.0
    %103 = vmatprep.subr.mxu0 0.0
    %104 = vmatpush1.xpose.msra.mxu0 0.0
    %105 = vmatprep.subr.mxu0 0.0
    %106 = vmatpush1.xpose.msra.mxu0 0.0
    %107 = vmatprep.subr.mxu0 0.0
    %108 = vmatpush1.xpose.msra.mxu0 0.0
    %109 = vmatprep.subr.mxu0 0.0
    %110 = vmatpush1.xpose.msra.mxu0 0.0
    %111 = vmatprep.mubr.f32.mxu0 %v44
    %112 = vmatmul.mubr.f32.gmra.mrb[0].mxu0 %v43
    %v113 = vpop.f32.mrb[0].mxu0
    %v114 = vadd.f32 0.0, %v113
    %v115 = vpop.f32.mrb[0].mxu0
    %116 = vdwg.mxu0
    %v117 = vadd.f32 %v42, %v114
    %vm118 = vcmask 64512
    %119 = vst.msk [vmem:[#allocation7] sm:$0xff] %vm118, %v117
    // Predicated region
    $region22: #{tpu_custom_call.1} parent=1 // pred_check
      %p120 = pneg %p36
    $region23: #{tpu_custom_call.1} parent=1 // pred_check_branch
      %122 = sbr.rel (%p120) target = $region25
    $region24: #{tpu_custom_call.1} parent=1 // pred_region
      %v123 = vld [vmem:[#allocation7] sm:$0xff]
      %v124 = vmul.f32 %v123, 0.00048828125
      %125 = vst.msk [vmem:[#allocation7] sm:$0xff] %vm118, %v124
    $region25: #{tpu_custom_call.1} parent=1 // pred_fallthru
      _
    // Predicated region
    $region26: #{tpu_custom_call.1} parent=1 // pred_check
      _
    $region27: #{tpu_custom_call.1} parent=1 // pred_check_branch
      %127 = sbr.rel (0) target = $region29
    $region28: #{tpu_custom_call.1} parent=1 // pred_region
      %s129 = ssub.s32 128, 128
      %130 = vsyncadd [#allocation4], %s129
      %s132 = sshll.u32 [#allocation7], 4
      %s133 = int_to_ptr.vmem [resolvable:$true] %s132
      %135 = dma.vmem_to_hbm [thread:$0]  %s133, 128, %s2, [#allocation4]
    $region29: #{tpu_custom_call.1} parent=1 // pred_fallthru
      _
    // Predicated region
    $region30: #{tpu_custom_call.1} parent=1 // pred_check
      _
    $region31: #{tpu_custom_call.1} parent=1 // pred_check_branch
      %137 = sbr.rel (0) target = $region33
    $region32: #{tpu_custom_call.1} parent=1 // pred_region
      %138 = dma.done [#allocation4], 128
    $region33: #{tpu_custom_call.1} parent=1 // pred_fallthru
      _
    %139 = vsyncpa [#allocation3], 1
    %140 = vsyncpa [#allocation6], 1
    %141 = vsyncpa [#allocation4], 1

</llo_original>
